<compile_context>
chip_gen: v6e
topology: v6e:2x2x1
jax: 0.10.0
libtpu: 0.0.40
codegen_flags: <defaults>
</compile_context>

<pallas_src>
import functools

import jax
import jax.numpy as jnp
from jax.experimental import pallas as pl
from jax.experimental.pallas import tpu as pltpu


def _round_up(a: int, b: int) -> int:
    return ((a + b - 1) // b) * b


def _ctc_decoder_kernel(x_ref, w_ref, b_ref, o_ref):
    # x_ref: (tm, H) bf16, w_ref: (H, Cp) bf16, b_ref: (1, Cp) f32, o_ref: (tm, Cp) f32
    logits = jnp.dot(x_ref[...], w_ref[...], preferred_element_type=jnp.float32)
    logits = logits + b_ref[...]                      # broadcast bias over rows (f32)
    # Numerically stable row-wise log-softmax (padded cols carry bias=-1e30 -> exp==0).
    m = jnp.max(logits, axis=-1, keepdims=True)
    shifted = logits - m
    lse = jnp.log(jnp.sum(jnp.exp(shifted), axis=-1, keepdims=True))
    o_ref[...] = (shifted - lse).astype(o_ref.dtype)


@functools.partial(jax.jit, static_argnames=("tile_m",))
def ctc_decoder_forward(listener_outputs, weight, bias, *, tile_m=256):
    """Pallas implementation of CTCDecoder.forward (inference: dropout = identity).

    listener_outputs: (B, T, H) float32
    weight:           (H, C)    float32   (transposed vs. torch's (C, H) Linear weight)
    bias:             (C,)      float32
    returns:          (B, T, C) float32 log-probabilities
    """
    B, T, H = listener_outputs.shape
    C = weight.shape[1]
    M = B * T

    # Lane-dense class dimension: pad C up to a multiple of 128.
    C_pad = _round_up(C, 128)

    # Row tile: as large as requested, clamped to the (8-aligned) row count so tiny
    # inputs do not ask for a block bigger than the array.
    tm = min(_round_up(max(tile_m, 8), 8), _round_up(M, 8))
    grid_m = pl.cdiv(M, tm)

    # bf16 MXU inputs; accumulation and log-softmax stay f32 inside the kernel.
    x = listener_outputs.reshape(M, H).astype(jnp.bfloat16)
    w = weight
    b = bias.astype(jnp.float32)
    if C_pad != C:
        # Padded weight columns are 0; padded bias entries are a large negative so the
        # padded logits contribute exp(~-1e30) == 0 to every row's normalizer.
        w = jnp.pad(w, ((0, 0), (0, C_pad - C)))
        b = jnp.concatenate([b, jnp.full((C_pad - C,), -1e30, dtype=jnp.float32)])
    w = w.astype(jnp.bfloat16)
    b2d = b.reshape(1, C_pad)

    # Explicit VMEM budget (weight single-buffered, x/out double-buffered) — keeps the
    # kernel inside v7x's 64 MiB while not relying on the scoped default.
    vmem_bytes = (
        H * C_pad * 2            # resident weight tile (bf16, single-buffered)
        + C_pad * 4              # bias row (f32)
        + 2 * tm * H * 2         # x double buffer (bf16)
        + 2 * tm * C_pad * 4     # out double buffer (f32)
    )
    vmem_limit = min(max(int(vmem_bytes * 1.5) + (8 << 20), 16 << 20), 64 << 20)

    cost = pl.CostEstimate(
        flops=2 * M * H * C_pad,
        transcendentals=M * C_pad,                       # exp per output element
        bytes_accessed=M * H * 2 + H * C_pad * 2 + C_pad * 4 + M * C_pad * 4,
    )

    # TODO(synk): for real CTC vocabularies (C >= a few thousand) the (H, C) weight
    # should additionally be tiled over a class grid axis with an online
    # (running-max / running-sum) log-softmax; the single resident weight tile here
    # assumes H * C_pad * 2 bytes fits comfortably in VMEM.
    out = pl.pallas_call(
        _ctc_decoder_kernel,
        out_shape=jax.ShapeDtypeStruct((M, C_pad), jnp.float32),
        grid_spec=pltpu.PrefetchScalarGridSpec(
            num_scalar_prefetch=0,
            grid=(grid_m,),
            in_specs=[
                pl.BlockSpec((tm, H), lambda i: (i, 0)),               # activations tile
                pl.BlockSpec((H, C_pad), lambda i: (0, 0),
                             pipeline_mode=pl.Buffered(1)),            # invariant weight
                pl.BlockSpec((1, C_pad), lambda i: (0, 0),
                             pipeline_mode=pl.Buffered(1)),            # invariant bias
            ],
            out_specs=pl.BlockSpec((tm, C_pad), lambda i: (i, 0)),
        ),
        compiler_params=pltpu.CompilerParams(
            dimension_semantics=("parallel",),
            vmem_limit_bytes=vmem_limit,
        ),
        cost_estimate=cost,
    )(x, w, b2d)

    # Drop padded classes (and any ragged rows of the final block) outside the kernel.
    return out[:M, :C].reshape(B, T, C)


if __name__ == "__main__":
    # Small shapes consistent with the module: B=2, maxlen=8, hidden=32, num_class=16.
    B, T, H, C = 2, 8, 32, 16

    key = jax.random.PRNGKey(0)
    kx, kw, kb = jax.random.split(key, 3)

    listener_outputs = jax.random.normal(kx, (B, T, H), dtype=jnp.float32)
    # torch Linear keeps weight as (C, H); we store it pre-transposed as (H, C).
    weight = jax.random.normal(kw, (H, C), dtype=jnp.float32) * (1.0 / jnp.sqrt(H))
    bias = jax.random.normal(kb, (C,), dtype=jnp.float32) * 0.01

    # TODO(synk): nn.Dropout is stochastic in train mode; inference (eval) semantics
    # are identity, which is what is implemented here.

    log_probs = ctc_decoder_forward(listener_outputs, weight, bias)
    jax.block_until_ready(log_probs)

    # Reference with identical numerics: bf16 matmul inputs, f32 accumulation,
    # f32 log-softmax.
    x_ref = listener_outputs.reshape(B * T, H).astype(jnp.bfloat16)
    w_ref = weight.astype(jnp.bfloat16)
    ref_logits = jnp.dot(x_ref, w_ref, preferred_element_type=jnp.float32) + bias
    ref = jax.nn.log_softmax(ref_logits, axis=-1).reshape(B, T, C)

    assert log_probs.shape == (B, T, C)
    max_err = float(jnp.max(jnp.abs(log_probs - ref)))
    assert jnp.allclose(log_probs, ref, atol=2e-4, rtol=2e-4), max_err
    # Sanity vs pure-f32 math (bf16 inputs introduce small, bounded error).
    f32_logits = listener_outputs.reshape(B * T, H) @ weight + bias
    f32_ref = jax.nn.log_softmax(f32_logits, axis=-1).reshape(B, T, C)
    assert jnp.allclose(log_probs, f32_ref, atol=5e-2, rtol=5e-2)
    # log_softmax rows must sum to 1 in prob space.
    assert jnp.allclose(jnp.exp(log_probs).sum(-1), 1.0, atol=1e-5)

    print("KERNEL_OK")
</pallas_src>

<mosaic_0001>
module attributes {stable_mosaic.version = 11 : i64} {
  func.func @_ctc_decoder_kernel(%arg0: i32, %arg1: memref<16x32xbf16, #tpu.memory_space<vmem>>, %arg2: memref<32x128xbf16, #tpu.memory_space<vmem>>, %arg3: memref<1x128xf32, #tpu.memory_space<vmem>>, %arg4: memref<16x128xf32, #tpu.memory_space<vmem>>) attributes {dimension_semantics = [#tpu.dimension_semantics<parallel>], iteration_bounds = array<i64: 1>, scalar_prefetch = 0 : i64, scratch_operands = 0 : i64, tpu.core_type = #tpu.core_type<tc>, window_params = [{transform_indices = @transform_0, window_bounds = array<i64: 16, 32>}, {pipeline_mode = #tpu.pipeline_mode<synchronous>, transform_indices = @transform_1, window_bounds = array<i64: 32, 128>}, {pipeline_mode = #tpu.pipeline_mode<synchronous>, transform_indices = @transform_2, window_bounds = array<i64: 1, 128>}, {transform_indices = @transform_3, window_bounds = array<i64: 16, 128>}]} {
    %c0 = arith.constant 0 : index
    %c0_0 = arith.constant 0 : index
    %0 = vector.load %arg1[%c0, %c0_0] : memref<16x32xbf16, #tpu.memory_space<vmem>>, vector<16x32xbf16>
    %c0_1 = arith.constant 0 : index
    %c0_2 = arith.constant 0 : index
    %1 = vector.load %arg2[%c0_1, %c0_2] : memref<32x128xbf16, #tpu.memory_space<vmem>>, vector<32x128xbf16>
    %cst = arith.constant dense<0.000000e+00> : vector<16x128xf32>
    %2 = tpu.matmul %0, %1, %cst {dimension_numbers = #tpu.dot_dimension_numbers<[1], [0], [0], [1], [0, 0, 1, 1], [], []>} : vector<16x32xbf16>, vector<32x128xbf16>, vector<16x128xf32> -> vector<16x128xf32>
    %c0_3 = arith.constant 0 : index
    %c0_4 = arith.constant 0 : index
    %3 = vector.load %arg3[%c0_3, %c0_4] : memref<1x128xf32, #tpu.memory_space<vmem>>, vector<1x128xf32>
    %4 = vector.broadcast %3 : vector<1x128xf32> to vector<16x128xf32>
    %5 = arith.addf %2, %4 : vector<16x128xf32>
    %cst_5 = arith.constant dense<0xFF800000> : vector<16xf32>
    %6 = vector.multi_reduction <maximumf>, %5, %cst_5 [1] : vector<16x128xf32> to vector<16xf32>
    %7 = vector.shape_cast %6 : vector<16xf32> to vector<16x1xf32>
    %8 = vector.broadcast %7 : vector<16x1xf32> to vector<16x128xf32>
    %9 = arith.subf %5, %8 : vector<16x128xf32>
    %10 = math.exp %9 : vector<16x128xf32>
    %cst_6 = arith.constant dense<0.000000e+00> : vector<16xf32>
    %11 = vector.multi_reduction <add>, %10, %cst_6 [1] : vector<16x128xf32> to vector<16xf32>
    %12 = vector.shape_cast %11 : vector<16xf32> to vector<16x1xf32>
    %13 = math.log %12 : vector<16x1xf32>
    %14 = vector.broadcast %13 : vector<16x1xf32> to vector<16x128xf32>
    %15 = arith.subf %9, %14 : vector<16x128xf32>
    %c0_7 = arith.constant 0 : index
    %c0_8 = arith.constant 0 : index
    %16 = vector.load %arg4[%c0_7, %c0_8] : memref<16x128xf32, #tpu.memory_space<vmem>>, vector<16x128xf32>
    tpu.vector_store %arg4[%c0_7, %c0_8], %15 {strides = array<i32>} : memref<16x128xf32, #tpu.memory_space<vmem>>, vector<16x128xf32>,
    return
  }
  func.func @transform_0(%arg0: i32) -> (i32, i32) {
    %c0_i32 = arith.constant 0 : i32
    %c0_i32_0 = arith.constant 0 : i32
    return %arg0, %c0_i32 : i32, i32
  }
  func.func @transform_1(%arg0: i32) -> (i32, i32) {
    %c0_i32 = arith.constant 0 : i32
    %c0_i32_0 = arith.constant 0 : i32
    %c0_i32_1 = arith.constant 0 : i32
    return %c0_i32, %c0_i32_0 : i32, i32
  }
  func.func @transform_2(%arg0: i32) -> (i32, i32) {
    %c0_i32 = arith.constant 0 : i32
    %c0_i32_0 = arith.constant 0 : i32
    %c0_i32_1 = arith.constant 0 : i32
    return %c0_i32, %c0_i32_0 : i32, i32
  }
  func.func @transform_3(%arg0: i32) -> (i32, i32) {
    %c0_i32 = arith.constant 0 : i32
    %c0_i32_0 = arith.constant 0 : i32
    return %arg0, %c0_i32 : i32, i32
  }
}

</mosaic_0001>

<llo_original>
// kernel: ctc_decoder_forward.1
$region0: #{ctc_decoder_forward.1}
  #allocation0 [shape = 'u32[]', space=smem, size = 0x4, offset = 0x4, fixed_abs, tag = 'smem constant byte address 0x4 - core index']
  #allocation1 [shape = 'u32[144,128]{1,0:T(1,128)}', space=vmem, size = 0x12000, scoped, tag = 'internal scratch']
  %s0 = inlined_call_operand.vmem [shape: bf16[16,32], index: 0, kind: input, shape index: {}]
  %s1 = inlined_call_operand.vmem [shape: bf16[32,128], index: 1, kind: input, shape index: {}]
  %s2 = inlined_call_operand.vmem [shape: f32[1,128], index: 2, kind: input, shape index: {}]
  %s3 = inlined_call_operand.vmem [shape: f32[16,128], index: 3, kind: output, shape index: {}]
  %s4 = sld [smem:[#allocation0]]
  $region22: #{ctc_decoder_forward.1} parent=0
    _
  %s6 = ssub.s32 1, %s4
  %s7 = scalar_select 0, %s6, %s4
  // Predicated region
  $region2: #{ctc_decoder_forward.1} parent=0 // pred_check
    _
  $region3: #{ctc_decoder_forward.1} parent=0 // pred_check_branch
    %9 = sbr.rel (0) target = $region5
  $region4: #{ctc_decoder_forward.1} parent=0 // pred_region
    _
  $region5: #{ctc_decoder_forward.1} parent=0 // pred_fallthru
    _
  // Predicated region
  $region6: #{ctc_decoder_forward.1} parent=0 // pred_check
    _
  $region7: #{ctc_decoder_forward.1} parent=0 // pred_check_branch
    %11 = sbr.rel (0) target = $region9
  $region8: #{ctc_decoder_forward.1} parent=0 // pred_region
    _
  $region9: #{ctc_decoder_forward.1} parent=0 // pred_fallthru
    _
  // Predicated region
  $region10: #{ctc_decoder_forward.1} parent=0 // pred_check
    _
  $region11: #{ctc_decoder_forward.1} parent=0 // pred_check_branch
    %13 = sbr.rel (0) target = $region13
  $region12: #{ctc_decoder_forward.1} parent=0 // pred_region
    _
  $region13: #{ctc_decoder_forward.1} parent=0 // pred_fallthru
    _
  %v15 = vld [vmem:[%s0] sm:$0xf]
  %v16 = vld [vmem:[%s0 + $0x4] sm:$0xf]
  %v17 = vld [vmem:[%s1] sm:$0xf]
  %v18 = vld [vmem:[%s1 + $0x4] sm:$0xf]
  %v19 = vld [vmem:[%s1 + $0x8] sm:$0xf]
  %v20 = vld [vmem:[%s1 + $0xc] sm:$0xf]
  %v21 = vld [vmem:[%s2] sm:$0x1]
  %v23 = vlaneseq
  %v24 = vshrl.u32 %v23, 7
  %v25 = vsub.s32 0, %v24
  %v26 = vrot.slane %v21, %v25
  %v30 = vunpack.c.l.b16 %v15
  %v31 = vunpack.c.l.b16 %v16
  %v32 = vpack.c.b16 %v31, %v30
  %v37 = vunpack.c.l.b16 %v17
  %v38 = vunpack.c.l.b16 %v18
  %v39 = vunpack.c.l.b16 %v19
  %v40 = vunpack.c.l.b16 %v20
  %v41 = vpack.c.b16 %v38, %v37
  %v42 = vpack.c.b16 %v40, %v39
  %vm45 = vcmask 261120
  %v47 = vsel %vm45, %v32, 0
  %49 = vmatprep.subr.bf16.mxu0 0
  %50 = vmatpush1.bf16.msra.mxu0 0
  %51 = vmatprep.subr.bf16.mxu0 0
  %52 = vmatpush1.bf16.msra.mxu0 0
  %53 = vmatprep.subr.bf16.mxu0 0
  %54 = vmatpush1.bf16.msra.mxu0 0
  %55 = vmatprep.subr.bf16.mxu0 0
  %56 = vmatpush1.bf16.msra.mxu0 0
  %57 = vmatprep.subr.bf16.mxu0 0
  %58 = vmatpush1.bf16.msra.mxu0 0
  %59 = vmatprep.subr.bf16.mxu0 0
  %60 = vmatpush1.bf16.msra.mxu0 0
  %61 = vmatprep.subr.bf16.mxu0 0
  %62 = vmatpush1.bf16.msra.mxu0 %v42
  %63 = vmatprep.subr.bf16.mxu0 0
  %64 = vmatpush1.bf16.msra.mxu0 %v41
  %65 = vmatprep.subr.bf16.mxu0 0
  %66 = vmatpush2.bf16.msra.mxu0 0
  %67 = vmatprep.subr.bf16.mxu0 0
  %68 = vmatpush2.bf16.msra.mxu0 0
  %69 = vmatprep.subr.bf16.mxu0 0
  %70 = vmatpush2.bf16.msra.mxu0 0
  %71 = vmatprep.subr.bf16.mxu0 0
  %72 = vmatpush2.bf16.msra.mxu0 0
  %73 = vmatprep.subr.bf16.mxu0 0
  %74 = vmatpush2.bf16.msra.mxu0 0
  %75 = vmatprep.subr.bf16.mxu0 0
  %76 = vmatpush2.bf16.msra.mxu0 0
  %77 = vmatprep.subr.bf16.mxu0 0
  %78 = vmatpush2.bf16.msra.mxu0 0
  %79 = vmatprep.subr.bf16.mxu0 0
  %80 = vmatpush2.bf16.msra.mxu0 0
  %81 = vmatprep.mubr.bf16.mxu0 0
  %82 = vmatmul.mubr.bf16.gmra.mxu0 %v47
  %v83 = vpop.f32.mrf.mxu0
  %v84 = vadd.f32 %v26, %v83
  %v85 = vpop.f32.mrf.mxu0
  %v86 = vpop.f32.mrf.mxu0
  %v87 = vadd.f32 %v26, %v86
  %v88 = vpop.f32.mrf.mxu0
  %89 = vdwg.mxu0
  %90 = vmax.xlane.f32.xlu0 %v84
  %v91 = vpop.xlane.xlu0 %90
  %92 = vmax.xlane.f32.xlu0 %v87
  %v93 = vpop.xlane.xlu0 %92
  %v94 = vsub.f32 %v84, %v91
  %v95 = vsub.f32 %v87, %v93
  %v96 = vmul.f32 %v94, 1.442695
  %v97 = vpow.pop %v96
  %v98 = vmul.f32 %v95, 1.442695
  %v99 = vpow.pop %v98
  %100 = vadd.xlane.f32.xlu0 %v97
  %v101 = vpop.xlane.xlu0 %100
  %102 = vadd.xlane.f32.xlu0 %v99
  %v103 = vpop.xlane.xlu0 %102
  %v104 = vlog2.pop %v101
  %v105 = vmul.f32 %v104, 0.6931472
  %v106 = vlog2.pop %v103
  %v107 = vmul.f32 %v106, 0.6931472
  %v108 = vsub.f32 %v94, %v105
  %v109 = vsub.f32 %v95, %v107
  %110 = vst [vmem:[%s3] sm:$0xff] %v108
  %111 = vst [vmem:[%s3 + $0x8] sm:$0xff] %v109
  // Predicated region
  $region14: #{ctc_decoder_forward.1} parent=0 // pred_check
    _
  $region15: #{ctc_decoder_forward.1} parent=0 // pred_check_branch
    %113 = sbr.rel (0) target = $region17
  $region16: #{ctc_decoder_forward.1} parent=0 // pred_region
    _
  $region17: #{ctc_decoder_forward.1} parent=0 // pred_fallthru
    _
  // Predicated region
  $region18: #{ctc_decoder_forward.1} parent=0 // pred_check
    _
  $region19: #{ctc_decoder_forward.1} parent=0 // pred_check_branch
    %115 = sbr.rel (0) target = $region21
  $region20: #{ctc_decoder_forward.1} parent=0 // pred_region
    _
  $region21: #{ctc_decoder_forward.1} parent=0 // pred_fallthru
    _

</llo_original>
